<compile_context>
chip_gen: v6e
topology: v6e:2x2x1
jax: 0.10.0
libtpu: 0.0.40
codegen_flags: <defaults>
</compile_context>

<pallas_src>
import jax
import jax.numpy as jnp
from jax.experimental import pallas as pl
from jax.experimental.pallas import tpu as pltpu


def _make_kernel(t_co, weight_sliced):
    def kernel(x_ref, w_ref, b_ref, o_ref):
        # x_ref: (1, Cin, t_hw)
        # w_ref: (Cout_p, Cin) if weight_sliced (full resident weight)
        #        (t_co,  Cin) otherwise (per-tile weight block)
        # b_ref: (t_co, 1)
        # o_ref: (1, t_co, t_hw)
        if weight_sliced:
            co = pl.program_id(2)
            start = pl.multiple_of(co * t_co, t_co)
            w = w_ref[pl.ds(start, t_co), :]
        else:
            w = w_ref[...]
        acc = jnp.dot(w, x_ref[0], preferred_element_type=jnp.float32)
        o_ref[0] = (acc + b_ref[...].astype(jnp.float32)).astype(o_ref.dtype)

    return kernel


def _vmem_capacity_bytes():
    try:
        return int(pltpu.get_tpu_info().vmem_capacity_bytes)
    except Exception:
        return 64 * 1024 * 1024  # conservative (v7x-sized) fallback


def conv1x1_pallas(x_nchw, weight, bias):
    """1x1 Conv2d forward.

    x_nchw: (N, C_in, H, W)
    weight: (C_out, C_in, 1, 1)   (PyTorch Conv2d weight layout)
    bias:   (C_out,)
    returns (N, C_out, H, W)
    """
    N, Cin, H, W = x_nchw.shape
    Cout = weight.shape[0]
    HW = H * W

    # Layout glue: reshapes only (no transposes, no extra HBM passes).
    x3d = x_nchw.reshape(N, Cin, HW)        # (N, Cin, HW)   channels=sublanes
    w2d = weight.reshape(Cout, Cin)         # (Cout, Cin)    keep caller dtype
    b2d = bias.reshape(Cout, 1)             # (Cout, 1)      broadcast over lanes

    x_isz = jnp.dtype(x3d.dtype).itemsize
    w_isz = jnp.dtype(w2d.dtype).itemsize
    b_isz = jnp.dtype(b2d.dtype).itemsize
    o_isz = x_isz                           # output dtype == input dtype

    # ---- per-generation VMEM sizing --------------------------------------
    vmem_cap = _vmem_capacity_bytes()
    if vmem_cap >= 100 * 1024 * 1024:       # v5e / v6e: 128 MiB physical VMEM
        vmem_limit = 96 * 1024 * 1024
        vmem_budget = 64 * 1024 * 1024
        max_hw_tile = 4096
    else:                                   # v7x: 64 MiB physical VMEM
        vmem_limit = 44 * 1024 * 1024
        vmem_budget = 40 * 1024 * 1024
        max_hw_tile = 2048

    # ---- Cout tiling (sublane axis of output / weight) -------------------
    if Cout <= 512:
        t_co, co_blocks = Cout, 1           # full dim: no divisibility needed
    else:
        t_co = 256                          # native MXU tile on v6e/v7x
        co_blocks = pl.cdiv(Cout, t_co)
    Cout_p = t_co * co_blocks
    if Cout_p != Cout:
        # Pad only the (tiny) weight/bias; the output keeps the real Cout and
        # the last co block's writeback is masked.  No extra pass over x or y.
        w2d = jnp.pad(w2d, ((0, Cout_p - Cout), (0, 0)))
        b2d = jnp.pad(b2d, ((0, Cout_p - Cout), (0, 0)))

    # Keep the weight fully resident unless it is genuinely large.
    weight_bytes = Cout_p * Cin * w_isz
    weight_resident = (co_blocks == 1) or (weight_bytes <= vmem_budget // 4)
    weight_sliced = weight_resident and co_blocks > 1

    # ---- HW tiling (lane axis): multiple of 128, VMEM-budget capped -------
    def vmem_est(t_hw):
        b_x = 2 * Cin * t_hw * x_isz                      # double-buffered x tile
        b_o = 2 * t_co * t_hw * o_isz                     # double-buffered out tile
        if weight_resident:
            b_w = 2 * Cout_p * Cin * w_isz                # conservative x2
        else:
            b_w = 2 * t_co * Cin * w_isz
        b_b = 2 * t_co * b_isz
        return b_x + b_o + b_w + b_b

    if HW <= 128:
        t_hw = HW                                         # full dim block
    else:
        t_hw = min(max_hw_tile, pl.cdiv(HW, 128) * 128)
        t_hw = max(128, (t_hw // 128) * 128)
        # v7x megacore: ensure >=2 grid steps along a parallel axis when the
        # batch and Cout axes can't provide them.
        if N == 1 and co_blocks == 1 and HW >= 256:
            half = max(128, ((HW // 2) // 128) * 128)
            t_hw = min(t_hw, half)
        while t_hw > 128 and vmem_est(t_hw) > vmem_budget:
            t_hw -= 128
    # TODO(synk): for very large Cin (t_hw forced below ~512 on v7x), add an
    # innermost "arbitrary" Cin-reduction grid axis with an f32 VMEM
    # accumulator instead of shrinking t_hw.

    hw_blocks = pl.cdiv(HW, t_hw)           # ragged last block: masked DMA
    grid = (N, hw_blocks, co_blocks)        # co innermost -> x tile resident

    x_spec = pl.BlockSpec((1, Cin, t_hw), lambda n, hw, co: (n, 0, hw))
    if weight_resident:
        w_spec = pl.BlockSpec((Cout_p, Cin), lambda n, hw, co: (0, 0))
    else:
        w_spec = pl.BlockSpec((t_co, Cin), lambda n, hw, co: (co, 0))
    b_spec = pl.BlockSpec((t_co, 1), lambda n, hw, co: (co, 0))   # tiny; tiled
    o_spec = pl.BlockSpec((1, t_co, t_hw), lambda n, hw, co: (n, co, hw))

    y3d = pl.pallas_call(
        _make_kernel(t_co, weight_sliced),
        out_shape=jax.ShapeDtypeStruct((N, Cout, HW), x_nchw.dtype),
        grid_spec=pltpu.PrefetchScalarGridSpec(
            num_scalar_prefetch=0,
            grid=grid,
            in_specs=[x_spec, w_spec, b_spec],
            out_specs=o_spec,
        ),
        compiler_params=pltpu.CompilerParams(
            dimension_semantics=("parallel", "parallel", "parallel"),
            vmem_limit_bytes=vmem_limit,
        ),
    )(x3d, w2d, b2d)

    return y3d.reshape(N, Cout, H, W)


if __name__ == "__main__":
    key = jax.random.PRNGKey(0)
    k_x, k_w, k_b = jax.random.split(key, 3)

    N, Cin, Cout, H, W = 2, 4, 8, 16, 16

    x = jax.random.normal(k_x, (N, Cin, H, W), dtype=jnp.float32)
    # Deterministic synthetic parameters (shapes match nn.Conv2d(Cin, Cout, 1)).
    weight = jax.random.normal(k_w, (Cout, Cin, 1, 1), dtype=jnp.float32) * 0.1
    bias = jax.random.normal(k_b, (Cout,), dtype=jnp.float32) * 0.1

    y = conv1x1_pallas(x, weight, bias)
    jax.block_until_ready(y)

    # Correctness check against a plain-JAX reference of the same conv.
    ref = (jnp.einsum("nchw,oc->nohw", x, weight.reshape(Cout, Cin))
           + bias[None, :, None, None])
    assert y.shape == (N, Cout, H, W)
    assert jnp.allclose(y, ref, atol=1e-5, rtol=1e-5)

    print("KERNEL_OK")
</pallas_src>

<mosaic_0001>
module attributes {stable_mosaic.version = 11 : i64} {
  func.func @kernel(%arg0: i32, %arg1: i32, %arg2: i32, %arg3: memref<1x4x256xf32, #tpu.memory_space<vmem>>, %arg4: memref<8x4xf32, #tpu.memory_space<vmem>>, %arg5: memref<8x1xf32, #tpu.memory_space<vmem>>, %arg6: memref<1x8x256xf32, #tpu.memory_space<vmem>>) attributes {dimension_semantics = [#tpu.dimension_semantics<parallel>, #tpu.dimension_semantics<parallel>, #tpu.dimension_semantics<parallel>], iteration_bounds = array<i64: 2, 1, 1>, scalar_prefetch = 0 : i64, scratch_operands = 0 : i64, tpu.core_type = #tpu.core_type<tc>, window_params = [{transform_indices = @transform_0, window_bounds = array<i64: 1, 4, 256>}, {pipeline_mode = #tpu.pipeline_mode<synchronous>, transform_indices = @transform_1, window_bounds = array<i64: 8, 4>}, {transform_indices = @transform_2, window_bounds = array<i64: 8, 1>}, {transform_indices = @transform_3, window_bounds = array<i64: 1, 8, 256>}]} {
    %c0 = arith.constant 0 : index
    %c0_0 = arith.constant 0 : index
    %0 = vector.load %arg4[%c0, %c0_0] : memref<8x4xf32, #tpu.memory_space<vmem>>, vector<8x4xf32>
    %c0_1 = arith.constant 0 : index
    %c0_2 = arith.constant 0 : index
    %c0_3 = arith.constant 0 : index
    %1 = vector.load %arg3[%c0_1, %c0_2, %c0_3] : memref<1x4x256xf32, #tpu.memory_space<vmem>>, vector<1x4x256xf32>
    %2 = vector.shape_cast %1 : vector<1x4x256xf32> to vector<4x256xf32>
    %cst = arith.constant dense<0.000000e+00> : vector<8x256xf32>
    %3 = tpu.matmul %0, %2, %cst {dimension_numbers = #tpu.dot_dimension_numbers<[1], [0], [0], [1], [0, 0, 1, 1], [], []>} : vector<8x4xf32>, vector<4x256xf32>, vector<8x256xf32> -> vector<8x256xf32>
    %c0_4 = arith.constant 0 : index
    %c0_5 = arith.constant 0 : index
    %4 = vector.load %arg5[%c0_4, %c0_5] : memref<8x1xf32, #tpu.memory_space<vmem>>, vector<8x1xf32>
    %5 = vector.broadcast %4 : vector<8x1xf32> to vector<8x256xf32>
    %6 = arith.addf %3, %5 : vector<8x256xf32>
    %c0_6 = arith.constant 0 : index
    %c0_7 = arith.constant 0 : index
    %c0_8 = arith.constant 0 : index
    %7 = vector.load %arg6[%c0_6, %c0_7, %c0_8] : memref<1x8x256xf32, #tpu.memory_space<vmem>>, vector<1x8x256xf32>
    %8 = vector.shape_cast %7 : vector<1x8x256xf32> to vector<8x256xf32>
    %9 = vector.shape_cast %6 : vector<8x256xf32> to vector<1x8x256xf32>
    tpu.vector_store %arg6[%c0_6, %c0_7, %c0_8], %9 {strides = array<i32>} : memref<1x8x256xf32, #tpu.memory_space<vmem>>, vector<1x8x256xf32>,
    return
  }
  func.func @transform_0(%arg0: i32, %arg1: i32, %arg2: i32) -> (i32, i32, i32) {
    %c0_i32 = arith.constant 0 : i32
    %c0_i32_0 = arith.constant 0 : i32
    return %arg0, %c0_i32, %arg1 : i32, i32, i32
  }
  func.func @transform_1(%arg0: i32, %arg1: i32, %arg2: i32) -> (i32, i32) {
    %c0_i32 = arith.constant 0 : i32
    %c0_i32_0 = arith.constant 0 : i32
    %c0_i32_1 = arith.constant 0 : i32
    return %c0_i32, %c0_i32_0 : i32, i32
  }
  func.func @transform_2(%arg0: i32, %arg1: i32, %arg2: i32) -> (i32, i32) {
    %c0_i32 = arith.constant 0 : i32
    %c0_i32_0 = arith.constant 0 : i32
    return %arg2, %c0_i32 : i32, i32
  }
  func.func @transform_3(%arg0: i32, %arg1: i32, %arg2: i32) -> (i32, i32, i32) {
    %c0_i32 = arith.constant 0 : i32
    return %arg0, %arg2, %arg1 : i32, i32, i32
  }
}

</mosaic_0001>

<llo_original>
// kernel: tpu_custom_call.1
$region0: #{tpu_custom_call.1}
  #allocation0 [shape = 'u32[]', space=smem, size = 0x4, offset = 0x4, fixed_abs, tag = 'smem constant byte address 0x4 - core index']
  #allocation1 [shape = 'u32[144,128]{1,0:T(1,128)}', space=vmem, size = 0x12000, scoped, tag = 'internal scratch']
  %s0 = inlined_call_operand.vmem [shape: f32[2,4,256], index: 0, kind: input, shape index: {}]
  %s1 = inlined_call_operand.vmem [shape: f32[8,4], index: 1, kind: input, shape index: {}]
  %s2 = inlined_call_operand.vmem [shape: f32[8,1], index: 2, kind: input, shape index: {}]
  %s3 = inlined_call_operand.hbm [shape: f32[2,8,256], index: 3, kind: output, shape index: {}]
  %s4 = sld [smem:[#allocation0]]
  $region45: #{tpu_custom_call.1} parent=0
    _
  %s6 = ssub.s32 1, %s4
  %s7 = scalar_select 0, %s6, %s4
  $region1: #{tpu_custom_call.1} parent=0
    #allocation2 [shape = 'u8[16384]{0}', space=vmem, size = 0x4000, scoped, tag = 'output window, operand 0']
    #allocation3 [shape = 's32[2]{0}', space=sflag, size = 0x8, scoped, tag = 'scoped memory for tpu_custom_call.1']
    %8 = vsyncpa [#allocation3], 0
    %s9 = scalar_lea.sflag [#allocation3], 1
    %10 = vsyncpa %s9, 0
    loop: start=0, step=1, limit=4
    $region2: #{tpu_custom_call.1} parent=1 // loop_pre_header
      _
    $region3: #{tpu_custom_call.1} parent=1 // loop_header
      %s12 = sphi 0, %s16
      %p13 = scmp.ge.s32.totalorder %s12, 4
      %s19 = sphi 0, %s38
      %s20 = sphi 0, %s34
      %s21 = sphi 0, %s30
      %s22 = sphi 0, %s19
      %s23 = sphi 0, %s20
      %s24 = sphi 0, %s21
      %s25 = sphi 0, %s22
      %s26 = sphi 0, %s23
      %s27 = sphi 0, %s24
      %s43 = sphi 0, %s45
      %s46 = sphi 0, %s43
      %s47 = sphi 0, %s46
      %s63 = sphi 0, %s47
      %s67 = sphi 0, %s67
      %s69 = sphi 0, %s67
      %s70 = sphi 0, %s69
      %s84 = sphi 0, %s70
      %s90 = sphi 0, %s92
      %s93 = sphi 0, %s90
      %s94 = sphi 0, %s93
      %s110 = sphi 0, %s94
      %s120 = sphi 0, %s122
      %s123 = sphi 0, %s120
      %s124 = sphi 0, %s123
      %s140 = sphi 0, %s124
    $region4: #{tpu_custom_call.1} parent=1 // loop_header_branch
      %15 = sbr.rel (%p13) target = $region8
    $region5: #{tpu_custom_call.1} parent=1 // loop_body
      %s17 = ssub.s32 %s12, 1
      %s18 = ssub.s32 %s12, 2
      %s28 = sadd.s32 1, %s21
      %p29 = scmp.ge.s32.totalorder %s28, 1
      %s30 = scalar_select %p29, 0, %s28
      %s31 = sadd.s32 1, %s20
      %s32 = scalar_select %p29, %s31, %s20
      %p33 = scmp.ge.s32.totalorder %s32, 1
      %s34 = scalar_select %p33, 0, %s32
      %s35 = sadd.s32 1, %s19
      %s36 = scalar_select %p33, %s35, %s19
      %p37 = scmp.ge.s32.totalorder %s36, 2
      %s38 = scalar_select %p37, 0, %s36
      %s39 = ssub.s32 %s19, %s38
      %s40 = ssub.s32 %s20, %s34
      %s41 = sor.u32 %s39, %s40
      %p42 = scmp.eq.s32.totalorder %s41, 0
      %s44 = sadd.s32 %s43, 1
      %s45 = scalar_select %p42, %s43, %s44
      %p48 = pneg %p42
      %p49 = scmp.eq.s32.totalorder %s12, 1
      %p50 = por %p48, %p49
      %p51 = scmp.ne.s32.totalorder %s43, %s46
      %p52 = scmp.eq.s32.totalorder %s12, 0
      %p53 = por %p51, %p52
      %p54 = scmp.ne.s32.totalorder %s43, %s46
      %p55 = scmp.eq.s32.totalorder %s17, 1
      %p56 = por %p54, %p55
      %p57 = scmp.ne.s32.totalorder %s46, %s47
      %p58 = scmp.eq.s32.totalorder %s17, 0
      %p59 = por %p57, %p58
      %p60 = scmp.ne.s32.totalorder %s46, %s47
      %p61 = scmp.eq.s32.totalorder %s18, 1
      %p62 = por %p60, %p61
      %p64 = scmp.ne.s32.totalorder %s47, %s63
      %p65 = scmp.eq.s32.totalorder %s18, 0
      %p66 = por %p64, %p65
      %s68 = sadd.s32 %s67, 1
      %p71 = scmp.eq.s32.totalorder %s12, 1
      %p72 = scmp.ne.s32.totalorder %s67, %s69
      %p73 = scmp.eq.s32.totalorder %s12, 0
      %p74 = por %p72, %p73
      %p75 = scmp.ne.s32.totalorder %s67, %s69
      %p76 = scmp.eq.s32.totalorder %s17, 1
      %p77 = por %p75, %p76
      %p78 = scmp.ne.s32.totalorder %s69, %s70
      %p79 = scmp.eq.s32.totalorder %s17, 0
      %p80 = por %p78, %p79
      %p81 = scmp.ne.s32.totalorder %s69, %s70
      %p82 = scmp.eq.s32.totalorder %s18, 1
      %p83 = por %p81, %p82
      %p85 = scmp.ne.s32.totalorder %s70, %s84
      %p86 = scmp.eq.s32.totalorder %s18, 0
      %p87 = por %p85, %p86
      %s88 = ssub.s32 %s21, %s30
      %p89 = scmp.eq.s32.totalorder %s88, 0
      %s91 = sadd.s32 %s90, 1
      %s92 = scalar_select %p89, %s90, %s91
      %p95 = pneg %p89
      %p96 = scmp.eq.s32.totalorder %s12, 1
      %p97 = por %p95, %p96
      %p98 = scmp.ne.s32.totalorder %s90, %s93
      %p99 = scmp.eq.s32.totalorder %s12, 0
      %p100 = por %p98, %p99
      %p101 = scmp.ne.s32.totalorder %s90, %s93
      %p102 = scmp.eq.s32.totalorder %s17, 1
      %p103 = por %p101, %p102
      %p104 = scmp.ne.s32.totalorder %s93, %s94
      %p105 = scmp.eq.s32.totalorder %s17, 0
      %p106 = por %p104, %p105
      %p107 = scmp.ne.s32.totalorder %s93, %s94
      %p108 = scmp.eq.s32.totalorder %s18, 1
      %p109 = por %p107, %p108
      %p111 = scmp.ne.s32.totalorder %s94, %s110
      %p112 = scmp.eq.s32.totalorder %s18, 0
      %p113 = por %p111, %p112
      %s114 = ssub.s32 %s19, %s38
      %s115 = ssub.s32 %s21, %s30
      %s116 = sor.u32 %s114, %s115
      %s117 = ssub.s32 %s20, %s34
      %s118 = sor.u32 %s116, %s117
      %p119 = scmp.eq.s32.totalorder %s118, 0
      %s121 = sadd.s32 %s120, 1
      %s122 = scalar_select %p119, %s120, %s121
      %p125 = pneg %p119
      %p126 = scmp.eq.s32.totalorder %s12, 1
      %p127 = por %p125, %p126
      %p128 = scmp.ne.s32.totalorder %s120, %s123
      %p129 = scmp.eq.s32.totalorder %s12, 0
      %p130 = por %p128, %p129
      %p131 = scmp.ne.s32.totalorder %s120, %s123
      %p132 = scmp.eq.s32.totalorder %s17, 1
      %p133 = por %p131, %p132
      %p134 = scmp.ne.s32.totalorder %s123, %s124
      %p135 = scmp.eq.s32.totalorder %s17, 0
      %p136 = por %p134, %p135
      %p137 = scmp.ne.s32.totalorder %s123, %s124
      %p138 = scmp.eq.s32.totalorder %s18, 1
      %p139 = por %p137, %p138
      %p141 = scmp.ne.s32.totalorder %s124, %s140
      %p142 = scmp.eq.s32.totalorder %s18, 0
      %p143 = por %p141, %p142
      %p144 = scmp.le.s32.totalorder 1, %s12
      %p145 = scmp.lt.s32.totalorder %s12, 3
      %p146 = pnand %p144, %p145
      %p147 = pneg %p146
      // Predicated region
      $region9: #{tpu_custom_call.1} parent=5 // pred_check
        _
      $region10: #{tpu_custom_call.1} parent=5 // pred_check_branch
        %149 = sbr.rel (%p146) target = $region12
      $region11: #{tpu_custom_call.1} parent=5 // pred_region
        %s150 = ssub.s32 %s12, 1
        // Predicated region
        $region13: #{tpu_custom_call.1} parent=11 // pred_check
          %p151 = pneg %p80
        $region14: #{tpu_custom_call.1} parent=11 // pred_check_branch
          %153 = sbr.rel (%p151) target = $region16
        $region15: #{tpu_custom_call.1} parent=11 // pred_region
          _
        $region16: #{tpu_custom_call.1} parent=11 // pred_fallthru
          _
        // Predicated region
        $region17: #{tpu_custom_call.1} parent=11 // pred_check
          %p154 = pneg %p106
        $region18: #{tpu_custom_call.1} parent=11 // pred_check_branch
          %156 = sbr.rel (%p154) target = $region20
        $region19: #{tpu_custom_call.1} parent=11 // pred_region
          %p157 = scmp.lt.s32.totalorder %s24, 0
          %s158 = scalar_select %p157, %s24, 0
          %s159 = smul.addr %s158, 8
          %s160 = scalar_lea.vmem %s2, %s159
        $region20: #{tpu_custom_call.1} parent=11 // pred_fallthru
          _
      $region12: #{tpu_custom_call.1} parent=5 // pred_fallthru
        _
      %p161 = scmp.lt.s32.totalorder %s12, 2
      // Predicated region
      $region21: #{tpu_custom_call.1} parent=5 // pred_check
        %p162 = pneg %p161
      $region22: #{tpu_custom_call.1} parent=5 // pred_check_branch
        %164 = sbr.rel (%p162) target = $region24
      $region23: #{tpu_custom_call.1} parent=5 // pred_region
        // Predicated region
        $region25: #{tpu_custom_call.1} parent=23 // pred_check
          %p165 = pneg %p53
        $region26: #{tpu_custom_call.1} parent=23 // pred_check_branch
          %167 = sbr.rel (%p165) target = $region28
        $region27: #{tpu_custom_call.1} parent=23 // pred_region
          %s168 = smul.u32 2, %s20
          %p169 = scmp.lt.s32.totalorder %s19, 1
          %s170 = scalar_select %p169, %s19, 1
          %p171 = scmp.lt.s32.totalorder %s168, 1
          %s172 = scalar_select %p171, %s168, 1
          %s173 = smul.addr %s170, 2
          %s174 = sadd.s32 %s172, %s173
          %s175 = smul.addr %s174, 4
          %s176 = scalar_lea.vmem %s0, %s175
          %s177 = smul.u32 2, %s20
        $region28: #{tpu_custom_call.1} parent=23 // pred_fallthru
          _
      $region24: #{tpu_custom_call.1} parent=5 // pred_fallthru
        _
      %p178 = scmp.le.s32.totalorder 1, %s12
      %p179 = scmp.lt.s32.totalorder %s12, 3
      %p180 = pnand %p178, %p179
      %p181 = pneg %p180
      // Predicated region
      $region29: #{tpu_custom_call.1} parent=5 // pred_check
        _
      $region30: #{tpu_custom_call.1} parent=5 // pred_check_branch
        %183 = sbr.rel (%p180) target = $region32
      $region31: #{tpu_custom_call.1} parent=5 // pred_region
        %s184 = ssub.s32 %s12, 1
        %s185 = smul.u32 2, %s23
        %p186 = scmp.lt.s32.totalorder %s22, 1
        %s187 = scalar_select %p186, %s22, 1
        %p188 = scmp.lt.s32.totalorder %s185, 1
        %s189 = scalar_select %p188, %s185, 1
        %s190 = smul.addr %s187, 2
        %s191 = sadd.s32 %s189, %s190
        %s192 = smul.addr %s191, 4
        %s193 = scalar_lea.vmem %s0, %s192
        %p194 = pneg %p59
        %p195 = pneg %p56
        %p196 = pneg %p80
        %p197 = pneg %p77
        %p198 = scmp.lt.s32.totalorder %s24, 0
        %s199 = scalar_select %p198, %s24, 0
        %s200 = smul.addr %s199, 8
        %s201 = scalar_lea.vmem %s2, %s200
        %p202 = pneg %p106
        %p203 = pneg %p103
        %p204 = pneg %p136
        %p205 = pneg %p133
        %s206 = sand.u32 %s123, 1
        %s207 = scalar_lea.sflag [#allocation3], %s206
        %s208 = sand.u32 %s123, 1
        %s209 = smul.addr %s208, 16
        %s210 = scalar_lea.vmem [#allocation2], %s209
        %s211 = smul.u32 2, %s23
        %p212 = scmp.lt.s32.totalorder %s22, 1
        %s213 = scalar_select %p212, %s22, 1
        %p214 = scmp.lt.s32.totalorder %s211, 1
        %s215 = scalar_select %p214, %s211, 1
        %s216 = smul.addr %s213, 2
        %s217 = sadd.s32 %s215, %s216
        %s218 = smul.addr %s217, 4
        %s219 = scalar_lea.vmem %s0, %s218
        %s220 = smul.u32 2, %s23
        %p221 = scmp.lt.s32.totalorder %s24, 0
        %s222 = scalar_select %p221, %s24, 0
        %s223 = smul.addr %s222, 8
        %s224 = scalar_lea.vmem %s2, %s223
        %s225 = smul.u32 2, %s23
        %v226 = vld [vmem:[%s1] sm:$0xff]
        %v227 = vld [vmem:[%s219] sm:$0xff]
        %v228 = vld [vmem:[%s224] sm:$0xff]
        %230 = vset.pattern.permute.xlu0 0
        %231 = vperm.xlu0 %230, %v228
        %v232 = vpop.permute.xlu0 %231
        %v235 = vcombine.high %v227, %v227
        %vm236 = vcmask 31744
        %v238 = vsel %vm236, %v226, 0
        %vm240 = vcmask 1043456
        %v241 = vsel %vm240, %v227, 0
        %v243 = vsel %vm240, %v235, 0
        %245 = vmatprep.subr.mxu0 0.0
        %246 = vmatpush1.msra.mxu0 0.0
        %247 = vmatprep.subr.mxu0 0.0
        %248 = vmatpush1.msra.mxu0 0.0
        %249 = vmatprep.subr.mxu0 0.0
        %250 = vmatpush1.msra.mxu0 0.0
        %251 = vmatprep.subr.mxu0 0.0
        %252 = vmatpush1.msra.mxu0 0.0
        %253 = vmatprep.subr.mxu0 0.0
        %254 = vmatpush1.msra.mxu0 0.0
        %255 = vmatprep.subr.mxu0 0.0
        %256 = vmatpush1.msra.mxu0 0.0
        %257 = vmatprep.subr.mxu0 0.0
        %258 = vmatpush1.msra.mxu0 0.0
        %259 = vmatprep.subr.mxu0 0.0
        %260 = vmatpush1.msra.mxu0 0.0
        %261 = vmatprep.subr.mxu0 0.0
        %262 = vmatpush1.msra.mxu0 0.0
        %263 = vmatprep.subr.mxu0 0.0
        %264 = vmatpush1.msra.mxu0 0.0
        %265 = vmatprep.subr.mxu0 0.0
        %266 = vmatpush1.msra.mxu0 0.0
        %267 = vmatprep.subr.mxu0 0.0
        %268 = vmatpush1.msra.mxu0 0.0
        %269 = vmatprep.subr.mxu0 0.0
        %270 = vmatpush1.msra.mxu0 0.0
        %271 = vmatprep.subr.mxu0 0.0
        %272 = vmatpush1.msra.mxu0 0.0
        %273 = vmatprep.subr.mxu0 0.0
        %274 = vmatpush1.msra.mxu0 0.0
        %275 = vmatprep.subr.mxu0 %v243
        %276 = vmatpush1.msra.mxu0 %v241
        %277 = vmatprep.subr.mxu0 0.0
        %278 = vmatpush2.msra.mxu0 0.0
        %279 = vmatprep.subr.mxu0 0.0
        %280 = vmatpush2.msra.mxu0 0.0
        %281 = vmatprep.subr.mxu0 0.0
        %282 = vmatpush2.msra.mxu0 0.0
        %283 = vmatprep.subr.mxu0 0.0
        %284 = vmatpush2.msra.mxu0 0.0
        %285 = vmatprep.subr.mxu0 0.0
        %286 = vmatpush2.msra.mxu0 0.0
        %287 = vmatprep.subr.mxu0 0.0
        %288 = vmatpush2.msra.mxu0 0.0
        %289 = vmatprep.subr.mxu0 0.0
        %290 = vmatpush2.msra.mxu0 0.0
        %291 = vmatprep.subr.mxu0 0.0
        %292 = vmatpush2.msra.mxu0 0.0
        %293 = vmatprep.subr.mxu0 0.0
        %294 = vmatpush2.msra.mxu0 0.0
        %295 = vmatprep.subr.mxu0 0.0
        %296 = vmatpush2.msra.mxu0 0.0
        %297 = vmatprep.subr.mxu0 0.0
        %298 = vmatpush2.msra.mxu0 0.0
        %299 = vmatprep.subr.mxu0 0.0
        %300 = vmatpush2.msra.mxu0 0.0
        %301 = vmatprep.subr.mxu0 0.0
        %302 = vmatpush2.msra.mxu0 0.0
        %303 = vmatprep.subr.mxu0 0.0
        %304 = vmatpush2.msra.mxu0 0.0
        %305 = vmatprep.subr.mxu0 0.0
        %306 = vmatpush2.msra.mxu0 0.0
        %307 = vmatprep.subr.mxu0 0.0
        %308 = vmatpush2.msra.mxu0 0.0
        %309 = vmatprep.mubr.f32.mxu0 0.0
        %310 = vmatmul.mubr.f32.gmra.mxu0 %v238
        %v311 = vpop.f32.mrf.mxu0
        %v312 = vadd.f32 %v232, %v311
        %v313 = vpop.f32.mrf.mxu0
        %v314 = vadd.f32 %v232, %v313
        %315 = vdwg.mxu0
        %316 = vst [vmem:[%s210] sm:$0xff] %v312
        %317 = vst [vmem:[%s210 + $0x8] sm:$0xff] %v314
        %s318 = sand.u32 %s123, 1
        %s319 = scalar_lea.sflag [#allocation3], %s318
        %s320 = sand.u32 %s123, 1
        %s321 = smul.addr %s320, 16
        %s322 = scalar_lea.vmem [#allocation2], %s321
        // Predicated region
        $region33: #{tpu_custom_call.1} parent=31 // pred_check
          %p323 = pneg %p133
        $region34: #{tpu_custom_call.1} parent=31 // pred_check_branch
          %325 = sbr.rel (%p323) target = $region36
        $region35: #{tpu_custom_call.1} parent=31 // pred_region
          %s326 = smul.u32 2, %s23
          %s328 = ssub.s32 256, 256
          %329 = vsyncadd %s319, %s328
          %s330 = smul.addr %s24, 2
          %s331 = sadd.s32 %s326, %s330
          %s332 = smul.addr %s22, 2
          %s333 = sadd.s32 %s331, %s332
          %s334 = smul.addr %s333, 128
          %s335 = scalar_lea.hbm %s3, %s334
          %s337 = sshll.u32 %s322, 4
          %s338 = int_to_ptr.vmem [resolvable:$true] %s337
          %340 = dma.vmem_to_hbm [thread:$0]  %s338, 256, %s335, %s319
        $region36: #{tpu_custom_call.1} parent=31 // pred_fallthru
          _
      $region32: #{tpu_custom_call.1} parent=5 // pred_fallthru
        _
      %p341 = scmp.le.s32.totalorder 2, %s12
      // Predicated region
      $region37: #{tpu_custom_call.1} parent=5 // pred_check
        %p342 = pneg %p341
      $region38: #{tpu_custom_call.1} parent=5 // pred_check_branch
        %344 = sbr.rel (%p342) target = $region40
      $region39: #{tpu_custom_call.1} parent=5 // pred_region
        %s345 = ssub.s32 %s12, 2
        // Predicated region
        $region41: #{tpu_custom_call.1} parent=39 // pred_check
          %p346 = pneg %p139
        $region42: #{tpu_custom_call.1} parent=39 // pred_check_branch
          %348 = sbr.rel (%p346) target = $region44
        $region43: #{tpu_custom_call.1} parent=39 // pred_region
          %s349 = sand.u32 %s124, 1
          %s350 = scalar_lea.sflag [#allocation3], %s349
          %s351 = sand.u32 %s124, 1
          %s352 = smul.addr %s351, 16
          %s353 = scalar_lea.vmem [#allocation2], %s352
          %354 = dma.done %s350, 256
        $region44: #{tpu_custom_call.1} parent=39 // pred_fallthru
          _
      $region40: #{tpu_custom_call.1} parent=5 // pred_fallthru
        _
    $region6: #{tpu_custom_call.1} parent=1 // loop_footer
      %s16 = sadd.s32 1, %s12
    $region7: #{tpu_custom_call.1} parent=1 // loop_footer_branch
      %11 = sbr.rel target = $region3
    $region8: #{tpu_custom_call.1} parent=1 // loop_exit
      _
    %355 = vsyncpa [#allocation3], 1
    %s356 = scalar_lea.sflag [#allocation3], 1
    %357 = vsyncpa %s356, 1

</llo_original>
